<compile_context>
chip_gen: v6e
topology: v6e:2x2x1
jax: 0.10.0
libtpu: 0.0.40
codegen_flags: <defaults>
</compile_context>

<pallas_src>
import math
import jax
import jax.numpy as jnp
from jax import lax
from jax.experimental import pallas as pl
from jax.experimental.pallas import tpu as pltpu

_INV_SQRT2 = 1.0 / math.sqrt(2.0)


def _gelu_exact(x):
    # PyTorch nn.GELU() default: 0.5 * x * (1 + erf(x / sqrt(2))), in f32.
    return 0.5 * x * (1.0 + lax.erf(x * _INV_SQRT2))


def _mlp_block_kernel(x_ref, w1_ref, b1_ref, w2_ref, b2_ref, o_ref, acc_ref):
    # x_ref:  (tm, E)   bf16 token-row tile
    # w1_ref: (E, tk)   bf16 chunk of lin1 weight
    # b1_ref: (1, tk)   f32 chunk of lin1 bias
    # w2_ref: (tk, E)   bf16 chunk of lin2 weight
    # b2_ref: (1, E)    f32 lin2 bias
    # acc_ref:(tm, E)   f32 accumulator (VMEM scratch, resident across k)
    k = pl.program_id(1)

    @pl.when(k == 0)
    def _init():
        acc_ref[...] = jnp.zeros_like(acc_ref)

    # (tm, E) @ (E, tk) on the MXU, f32 accumulation.
    h = jnp.dot(x_ref[...], w1_ref[...], preferred_element_type=jnp.float32)
    h = _gelu_exact(h + b1_ref[...])

    # Partial second matmul: (tm, tk) @ (tk, E), accumulated in f32.
    acc_ref[...] += jnp.dot(h.astype(w2_ref.dtype), w2_ref[...],
                            preferred_element_type=jnp.float32)

    @pl.when(k == pl.num_programs(1) - 1)
    def _finalize():
        o_ref[...] = (acc_ref[...] + b2_ref[...]).astype(o_ref.dtype)


def _round_up(a, b):
    return ((a + b - 1) // b) * b


def mlp_block(x, w1, b1, w2, b2, *, tm=512, tk=1024, compute_dtype=jnp.bfloat16):
    """Fused MLP block.

    x : (..., E); w1: (E, M); b1: (M,); w2: (M, E); b2: (E,)
    Weights are stored in math orientation (transpose of torch's (out, in)).
    """
    *lead, E = x.shape
    M = w1.shape[1]
    N = 1
    for d in lead:
        N *= d
    out_dtype = x.dtype
    c_isz = jnp.dtype(compute_dtype).itemsize
    o_isz = jnp.dtype(out_dtype).itemsize

    # ---- padded problem sizes -------------------------------------------------
    E_pad = _round_up(E, 128)                     # lane-dense loads/stores
    tm_eff = min(tm, _round_up(N, 8))             # row tile (>= 8 sublanes)
    n_pad = _round_up(N, tm_eff)
    tk_eff = min(tk, _round_up(M, 128))           # mlp_dim chunk
    m_pad = _round_up(M, tk_eff)

    # ---- prepare operands (bf16 MXU inputs, f32 biases) -----------------------
    x2 = x.reshape(N, E).astype(compute_dtype)
    x2 = jnp.pad(x2, ((0, n_pad - N), (0, E_pad - E)))
    w1c = jnp.pad(w1.astype(compute_dtype), ((0, E_pad - E), (0, m_pad - M)))
    w2c = jnp.pad(w2.astype(compute_dtype), ((0, m_pad - M), (0, E_pad - E)))
    b1_2 = jnp.pad(b1.astype(jnp.float32), (0, m_pad - M)).reshape(1, m_pad)
    b2_2 = jnp.pad(b2.astype(jnp.float32), (0, E_pad - E)).reshape(1, E_pad)

    grid = (n_pad // tm_eff, m_pad // tk_eff)

    # ---- advisory cost + VMEM budget ------------------------------------------
    cost = pl.CostEstimate(
        flops=4 * N * E * M,               # two matmuls
        transcendentals=N * M,             # erf inside GELU
        bytes_accessed=(n_pad * E_pad * c_isz                      # x
                        + grid[0] * E_pad * m_pad * c_isz          # w1 (streamed / row tile)
                        + grid[0] * m_pad * E_pad * c_isz          # w2
                        + (m_pad + E_pad) * 4                      # biases
                        + n_pad * E_pad * o_isz),                  # out
    )
    vmem_est = (2 * (tm_eff * E_pad * c_isz          # x tile (double buffered)
                     + E_pad * tk_eff * c_isz        # w1 chunk
                     + tk_eff * 4                    # b1 chunk
                     + tk_eff * E_pad * c_isz        # w2 chunk
                     + E_pad * 4                     # b2
                     + tm_eff * E_pad * o_isz)       # out tile
                + tm_eff * E_pad * 4)                # f32 accumulator
    vmem_limit = min(max(2 * vmem_est, 32 * 1024 * 1024), 48 * 1024 * 1024)

    out2 = pl.pallas_call(
        _mlp_block_kernel,
        out_shape=jax.ShapeDtypeStruct((n_pad, E_pad), out_dtype),
        grid_spec=pltpu.PrefetchScalarGridSpec(
            num_scalar_prefetch=0,
            grid=grid,
            in_specs=[
                pl.BlockSpec((tm_eff, E_pad), lambda i, k: (i, 0)),   # x row tile
                pl.BlockSpec((E_pad, tk_eff), lambda i, k: (0, k)),   # w1 chunk
                pl.BlockSpec((1, tk_eff), lambda i, k: (0, k)),       # b1 chunk
                pl.BlockSpec((tk_eff, E_pad), lambda i, k: (k, 0)),   # w2 chunk
                pl.BlockSpec((1, E_pad), lambda i, k: (0, 0)),        # b2
            ],
            out_specs=pl.BlockSpec((tm_eff, E_pad), lambda i, k: (i, 0)),
            scratch_shapes=[pltpu.VMEM((tm_eff, E_pad), jnp.float32)],
        ),
        compiler_params=pltpu.CompilerParams(
            dimension_semantics=("parallel", "arbitrary"),
            vmem_limit_bytes=vmem_limit,
        ),
        cost_estimate=cost,
    )(x2, w1c, b1_2, w2c, b2_2)

    return out2[:N, :E].reshape(*lead, E)


def _init_params(key, embedding_dim, mlp_dim, dtype=jnp.float32):
    # Deterministic init mimicking nn.Linear's Kaiming-uniform defaults.
    k1, k2, k3, k4 = jax.random.split(key, 4)
    bound1 = 1.0 / math.sqrt(embedding_dim)
    bound2 = 1.0 / math.sqrt(mlp_dim)
    # Stored in math orientation (in, out) = transpose of torch (out, in).
    w1 = jax.random.uniform(k1, (embedding_dim, mlp_dim), dtype, -bound1, bound1)
    b1 = jax.random.uniform(k2, (mlp_dim,), dtype, -bound1, bound1)
    w2 = jax.random.uniform(k3, (mlp_dim, embedding_dim), dtype, -bound2, bound2)
    b2 = jax.random.uniform(k4, (embedding_dim,), dtype, -bound2, bound2)
    return w1, b1, w2, b2


if __name__ == "__main__":
    B, S, E, M = 2, 8, 32, 64
    key = jax.random.PRNGKey(0)
    kx, kp = jax.random.split(key)
    x = jax.random.normal(kx, (B, S, E), jnp.float32)
    w1, b1, w2, b2 = _init_params(kp, E, M)

    y = mlp_block(x, w1, b1, w2, b2)
    jax.block_until_ready(y)

    f32 = jnp.float32

    # Reference mirroring the kernel's bf16 MXU inputs / f32 accumulation.
    xb = x.reshape(-1, E).astype(jnp.bfloat16).astype(f32)
    w1b = w1.astype(jnp.bfloat16).astype(f32)
    w2b = w2.astype(jnp.bfloat16).astype(f32)
    h = xb @ w1b + b1
    h = 0.5 * h * (1.0 + lax.erf(h * _INV_SQRT2))
    hb = h.astype(jnp.bfloat16).astype(f32)
    y_bf16_ref = (hb @ w2b + b2).reshape(B, S, E)
    assert jnp.allclose(y, y_bf16_ref, atol=1e-2, rtol=1e-2), "mismatch vs bf16 reference"

    # Loose sanity check against the full-f32 PyTorch-equivalent math.
    h32 = x.reshape(-1, E) @ w1 + b1
    h32 = 0.5 * h32 * (1.0 + lax.erf(h32 * _INV_SQRT2))
    y_f32_ref = (h32 @ w2 + b2).reshape(B, S, E)
    assert jnp.allclose(y, y_f32_ref, atol=5e-2, rtol=5e-2), "mismatch vs f32 reference"

    print("KERNEL_OK")
</pallas_src>

<mosaic_0001>
module attributes {stable_mosaic.version = 11 : i64} {
  func.func @_mlp_block_kernel(%arg0: i32, %arg1: i32, %arg2: memref<16x128xbf16, #tpu.memory_space<vmem>>, %arg3: memref<128x128xbf16, #tpu.memory_space<vmem>>, %arg4: memref<1x128xf32, #tpu.memory_space<vmem>>, %arg5: memref<128x128xbf16, #tpu.memory_space<vmem>>, %arg6: memref<1x128xf32, #tpu.memory_space<vmem>>, %arg7: memref<16x128xf32, #tpu.memory_space<vmem>>, %arg8: memref<16x128xf32, #tpu.memory_space<vmem>>) attributes {dimension_semantics = [#tpu.dimension_semantics<parallel>, #tpu.dimension_semantics<arbitrary>], iteration_bounds = array<i64: 1, 1>, scalar_prefetch = 0 : i64, scratch_operands = 1 : i64, tpu.core_type = #tpu.core_type<tc>, window_params = [{transform_indices = @transform_0, window_bounds = array<i64: 16, 128>}, {transform_indices = @transform_1, window_bounds = array<i64: 128, 128>}, {transform_indices = @transform_2, window_bounds = array<i64: 1, 128>}, {transform_indices = @transform_3, window_bounds = array<i64: 128, 128>}, {pipeline_mode = #tpu.pipeline_mode<synchronous>, transform_indices = @transform_4, window_bounds = array<i64: 1, 128>}, {transform_indices = @transform_5, window_bounds = array<i64: 16, 128>}]} {
    %c0_i32 = arith.constant 0 : i32
    %0 = arith.cmpi eq, %arg1, %c0_i32 : i32
    %1 = arith.extui %0 : i1 to i32
    %c0_i32_0 = arith.constant 0 : i32
    %2 = arith.cmpi ne, %1, %c0_i32_0 : i32
    scf.if %2 {
      %cst_18 = arith.constant 0.000000e+00 : f32
      %26 = vector.broadcast %cst_18 : f32 to vector<16x128xf32>
      %c0_19 = arith.constant 0 : index
      %c0_20 = arith.constant 0 : index
      %27 = vector.load %arg8[%c0_19, %c0_20] : memref<16x128xf32, #tpu.memory_space<vmem>>, vector<16x128xf32>
      tpu.vector_store %arg8[%c0_19, %c0_20], %26 {strides = array<i32>} : memref<16x128xf32, #tpu.memory_space<vmem>>, vector<16x128xf32>,
    } else {
    }
    %c0 = arith.constant 0 : index
    %c0_1 = arith.constant 0 : index
    %3 = vector.load %arg2[%c0, %c0_1] : memref<16x128xbf16, #tpu.memory_space<vmem>>, vector<16x128xbf16>
    %c0_2 = arith.constant 0 : index
    %c0_3 = arith.constant 0 : index
    %4 = vector.load %arg3[%c0_2, %c0_3] : memref<128x128xbf16, #tpu.memory_space<vmem>>, vector<128x128xbf16>
    %cst = arith.constant dense<0.000000e+00> : vector<16x128xf32>
    %5 = tpu.matmul %3, %4, %cst {dimension_numbers = #tpu.dot_dimension_numbers<[1], [0], [0], [1], [0, 0, 1, 1], [], []>} : vector<16x128xbf16>, vector<128x128xbf16>, vector<16x128xf32> -> vector<16x128xf32>
    %c0_4 = arith.constant 0 : index
    %c0_5 = arith.constant 0 : index
    %6 = vector.load %arg4[%c0_4, %c0_5] : memref<1x128xf32, #tpu.memory_space<vmem>>, vector<1x128xf32>
    %7 = vector.broadcast %6 : vector<1x128xf32> to vector<16x128xf32>
    %8 = arith.addf %5, %7 : vector<16x128xf32>
    %cst_6 = arith.constant 5.000000e-01 : f32
    %9 = vector.broadcast %cst_6 : f32 to vector<16x128xf32>
    %10 = arith.mulf %9, %8 : vector<16x128xf32>
    %cst_7 = arith.constant 0.707106769 : f32
    %11 = vector.broadcast %cst_7 : f32 to vector<16x128xf32>
    %12 = arith.mulf %8, %11 : vector<16x128xf32>
    %13 = math.erf %12 : vector<16x128xf32>
    %cst_8 = arith.constant 1.000000e+00 : f32
    %14 = vector.broadcast %cst_8 : f32 to vector<16x128xf32>
    %15 = arith.addf %14, %13 : vector<16x128xf32>
    %16 = arith.mulf %10, %15 : vector<16x128xf32>
    %c0_9 = arith.constant 0 : index
    %c0_10 = arith.constant 0 : index
    %17 = vector.load %arg8[%c0_9, %c0_10] : memref<16x128xf32, #tpu.memory_space<vmem>>, vector<16x128xf32>
    %18 = arith.truncf %16 : vector<16x128xf32> to vector<16x128xbf16>
    %c0_11 = arith.constant 0 : index
    %c0_12 = arith.constant 0 : index
    %19 = vector.load %arg5[%c0_11, %c0_12] : memref<128x128xbf16, #tpu.memory_space<vmem>>, vector<128x128xbf16>
    %cst_13 = arith.constant dense<0.000000e+00> : vector<16x128xf32>
    %20 = tpu.matmul %18, %19, %cst_13 {dimension_numbers = #tpu.dot_dimension_numbers<[1], [0], [0], [1], [0, 0, 1, 1], [], []>} : vector<16x128xbf16>, vector<128x128xbf16>, vector<16x128xf32> -> vector<16x128xf32>
    %21 = arith.addf %17, %20 : vector<16x128xf32>
    %c0_14 = arith.constant 0 : index
    %c0_15 = arith.constant 0 : index
    %22 = vector.load %arg8[%c0_14, %c0_15] : memref<16x128xf32, #tpu.memory_space<vmem>>, vector<16x128xf32>
    tpu.vector_store %arg8[%c0_14, %c0_15], %21 {strides = array<i32>} : memref<16x128xf32, #tpu.memory_space<vmem>>, vector<16x128xf32>,
    %c0_i32_16 = arith.constant 0 : i32
    %23 = arith.cmpi eq, %arg1, %c0_i32_16 : i32
    %24 = arith.extui %23 : i1 to i32
    %c0_i32_17 = arith.constant 0 : i32
    %25 = arith.cmpi ne, %24, %c0_i32_17 : i32
    scf.if %25 {
      %c0_18 = arith.constant 0 : index
      %c0_19 = arith.constant 0 : index
      %26 = vector.load %arg8[%c0_18, %c0_19] : memref<16x128xf32, #tpu.memory_space<vmem>>, vector<16x128xf32>
      %c0_20 = arith.constant 0 : index
      %c0_21 = arith.constant 0 : index
      %27 = vector.load %arg6[%c0_20, %c0_21] : memref<1x128xf32, #tpu.memory_space<vmem>>, vector<1x128xf32>
      %28 = vector.broadcast %27 : vector<1x128xf32> to vector<16x128xf32>
      %29 = arith.addf %26, %28 : vector<16x128xf32>
      %c0_22 = arith.constant 0 : index
      %c0_23 = arith.constant 0 : index
      %30 = vector.load %arg7[%c0_22, %c0_23] : memref<16x128xf32, #tpu.memory_space<vmem>>, vector<16x128xf32>
      tpu.vector_store %arg7[%c0_22, %c0_23], %29 {strides = array<i32>} : memref<16x128xf32, #tpu.memory_space<vmem>>, vector<16x128xf32>,
    } else {
    }
    return
  }
  func.func @transform_0(%arg0: i32, %arg1: i32) -> (i32, i32) {
    %c0_i32 = arith.constant 0 : i32
    %c0_i32_0 = arith.constant 0 : i32
    return %arg0, %c0_i32 : i32, i32
  }
  func.func @transform_1(%arg0: i32, %arg1: i32) -> (i32, i32) {
    %c0_i32 = arith.constant 0 : i32
    %c0_i32_0 = arith.constant 0 : i32
    return %c0_i32, %arg1 : i32, i32
  }
  func.func @transform_2(%arg0: i32, %arg1: i32) -> (i32, i32) {
    %c0_i32 = arith.constant 0 : i32
    %c0_i32_0 = arith.constant 0 : i32
    return %c0_i32, %arg1 : i32, i32
  }
  func.func @transform_3(%arg0: i32, %arg1: i32) -> (i32, i32) {
    %c0_i32 = arith.constant 0 : i32
    %c0_i32_0 = arith.constant 0 : i32
    return %arg1, %c0_i32 : i32, i32
  }
  func.func @transform_4(%arg0: i32, %arg1: i32) -> (i32, i32) {
    %c0_i32 = arith.constant 0 : i32
    %c0_i32_0 = arith.constant 0 : i32
    %c0_i32_1 = arith.constant 0 : i32
    return %c0_i32, %c0_i32_0 : i32, i32
  }
  func.func @transform_5(%arg0: i32, %arg1: i32) -> (i32, i32) {
    %c0_i32 = arith.constant 0 : i32
    %c0_i32_0 = arith.constant 0 : i32
    return %arg0, %c0_i32 : i32, i32
  }
}

</mosaic_0001>

<llo_original>
// kernel: tpu_custom_call.1
$region0: #{tpu_custom_call.1}
  #allocation0 [shape = 'u32[]', space=smem, size = 0x4, offset = 0x4, fixed_abs, tag = 'smem constant byte address 0x4 - core index']
  #allocation1 [shape = 'u32[144,128]{1,0:T(1,128)}', space=vmem, size = 0x12000, scoped, tag = 'internal scratch']
  #allocation2 [shape = 'f32[16,128]{1,0:T(8,128)}', space=vmem, size = 0x2000, scoped, tag = 'scratch operand']
  %s0 = inlined_call_operand.hbm [shape: bf16[16,128], index: 0, kind: input, shape index: {}]
  %s1 = inlined_call_operand.hbm [shape: bf16[128,128], index: 1, kind: input, shape index: {}]
  %s2 = inlined_call_operand.vmem [shape: f32[1,128], index: 2, kind: input, shape index: {}]
  %s3 = inlined_call_operand.hbm [shape: bf16[128,128], index: 3, kind: input, shape index: {}]
  %s4 = inlined_call_operand.vmem [shape: f32[1,128], index: 4, kind: input, shape index: {}]
  %s5 = inlined_call_operand.hbm [shape: f32[16,128], index: 5, kind: output, shape index: {}]
  %s6 = sld [smem:[#allocation0]]
  $region50: #{tpu_custom_call.1} parent=0
    _
  %s8 = ssub.s32 1, %s6
  %s9 = scalar_select 0, %s8, %s6
  $region1: #{tpu_custom_call.1} parent=0
    #allocation3 [shape = 'u8[4096]{0}', space=vmem, size = 0x1000, scoped, tag = 'input window, operand 0, single buffered']
    #allocation4 [shape = 's32[1]{0}', space=sflag, size = 0x4, scoped, tag = 'scoped memory for tpu_custom_call.1']
    #allocation5 [shape = 's32[1]{0}', space=sflag, size = 0x4, scoped, tag = 'scoped memory for tpu_custom_call.1']
    #allocation6 [shape = 'u8[32768]{0}', space=vmem, size = 0x8000, scoped, tag = 'input window, operand 1, single buffered']
    #allocation7 [shape = 's32[1]{0}', space=sflag, size = 0x4, scoped, tag = 'scoped memory for tpu_custom_call.1']
    #allocation8 [shape = 'u8[32768]{0}', space=vmem, size = 0x8000, scoped, tag = 'input window, operand 3, single buffered']
    #allocation9 [shape = 'u8[8192]{0}', space=vmem, size = 0x2000, scoped, tag = 'output window, operand 0, single buffered']
    %10 = vsyncpa [#allocation4], 0
    %11 = vsyncpa [#allocation7], 0
    %12 = vsyncpa [#allocation5], 0
    // Predicated region
    $region2: #{tpu_custom_call.1} parent=1 // pred_check
      _
    $region3: #{tpu_custom_call.1} parent=1 // pred_check_branch
      %14 = sbr.rel (0) target = $region5
    $region4: #{tpu_custom_call.1} parent=1 // pred_region
      %s16 = ssub.s32 128, 128
      %17 = vsyncadd [#allocation4], %s16
      %s18 = sshll.u32 [#allocation3], 4
      %s19 = int_to_ptr.vmem [resolvable:$true] %s18
      %24 = dma.hbm_to_vmem [thread:$0]  %s0, 128, %s19, [#allocation4], 64, 64, 4
    $region5: #{tpu_custom_call.1} parent=1 // pred_fallthru
      _
    // Predicated region
    $region6: #{tpu_custom_call.1} parent=1 // pred_check
      _
    $region7: #{tpu_custom_call.1} parent=1 // pred_check_branch
      %26 = sbr.rel (0) target = $region9
    $region8: #{tpu_custom_call.1} parent=1 // pred_region
      %s28 = ssub.s32 1024, 1024
      %29 = vsyncadd [#allocation7], %s28
      %s30 = sshll.u32 [#allocation6], 4
      %s31 = int_to_ptr.vmem [resolvable:$true] %s30
      %36 = dma.hbm_to_vmem [thread:$0]  %s1, 1024, %s31, [#allocation7], 64, 64, 4
    $region9: #{tpu_custom_call.1} parent=1 // pred_fallthru
      _
    // Predicated region
    $region10: #{tpu_custom_call.1} parent=1 // pred_check
      _
    $region11: #{tpu_custom_call.1} parent=1 // pred_check_branch
      %38 = sbr.rel (0) target = $region13
    $region12: #{tpu_custom_call.1} parent=1 // pred_region
      _
    $region13: #{tpu_custom_call.1} parent=1 // pred_fallthru
      _
    // Predicated region
    $region14: #{tpu_custom_call.1} parent=1 // pred_check
      _
    $region15: #{tpu_custom_call.1} parent=1 // pred_check_branch
      %40 = sbr.rel (0) target = $region17
    $region16: #{tpu_custom_call.1} parent=1 // pred_region
      %s42 = ssub.s32 1024, 1024
      %43 = vsyncadd [#allocation7], %s42
      %s44 = sshll.u32 [#allocation8], 4
      %s45 = int_to_ptr.vmem [resolvable:$true] %s44
      %50 = dma.hbm_to_vmem [thread:$0]  %s3, 1024, %s45, [#allocation7], 64, 64, 4
    $region17: #{tpu_custom_call.1} parent=1 // pred_fallthru
      _
    // Predicated region
    $region18: #{tpu_custom_call.1} parent=1 // pred_check
      _
    $region19: #{tpu_custom_call.1} parent=1 // pred_check_branch
      %52 = sbr.rel (0) target = $region21
    $region20: #{tpu_custom_call.1} parent=1 // pred_region
      _
    $region21: #{tpu_custom_call.1} parent=1 // pred_fallthru
      _
    // Predicated region
    $region22: #{tpu_custom_call.1} parent=1 // pred_check
      _
    $region23: #{tpu_custom_call.1} parent=1 // pred_check_branch
      %54 = sbr.rel (0) target = $region25
    $region24: #{tpu_custom_call.1} parent=1 // pred_region
      %55 = dma.done [#allocation4], 128
    $region25: #{tpu_custom_call.1} parent=1 // pred_fallthru
      _
    // Predicated region
    $region26: #{tpu_custom_call.1} parent=1 // pred_check
      _
    $region27: #{tpu_custom_call.1} parent=1 // pred_check_branch
      %57 = sbr.rel (0) target = $region29
    $region28: #{tpu_custom_call.1} parent=1 // pred_region
      %58 = dma.done [#allocation7], 1024
    $region29: #{tpu_custom_call.1} parent=1 // pred_fallthru
      _
    // Predicated region
    $region30: #{tpu_custom_call.1} parent=1 // pred_check
      _
    $region31: #{tpu_custom_call.1} parent=1 // pred_check_branch
      %60 = sbr.rel (0) target = $region33
    $region32: #{tpu_custom_call.1} parent=1 // pred_region
      %61 = dma.done [#allocation7], 1024
    $region33: #{tpu_custom_call.1} parent=1 // pred_fallthru
      _
    %p63 = scmp.eq.s32.totalorder 0, 0
    // Predicated region
    $region34: #{tpu_custom_call.1} parent=1 // pred_check
      %p64 = pneg %p63
    $region35: #{tpu_custom_call.1} parent=1 // pred_check_branch
      %66 = sbr.rel (%p64) target = $region37
    $region36: #{tpu_custom_call.1} parent=1 // pred_region
      %67 = vst [vmem:[#allocation2] sm:$0xff] 0.0
      %68 = vst [vmem:[#allocation2 + $0x8] sm:$0xff] 0.0
    $region37: #{tpu_custom_call.1} parent=1 // pred_fallthru
      _
    %v69 = vld [vmem:[#allocation3] sm:$0xf]
    %v70 = vld [vmem:[#allocation3 + $0x4] sm:$0xf]
    %v71 = vld [vmem:[#allocation6] sm:$0xf]
    %v72 = vld [vmem:[#allocation6 + $0x4] sm:$0xf]
    %v73 = vld [vmem:[#allocation6 + $0x8] sm:$0xf]
    %v74 = vld [vmem:[#allocation6 + $0xc] sm:$0xf]
    %v75 = vld [vmem:[#allocation6 + $0x10] sm:$0xf]
    %v76 = vld [vmem:[#allocation6 + $0x14] sm:$0xf]
    %v77 = vld [vmem:[#allocation6 + $0x18] sm:$0xf]
    %v78 = vld [vmem:[#allocation6 + $0x1c] sm:$0xf]
    %v79 = vld [vmem:[#allocation6 + $0x20] sm:$0xf]
    %v80 = vld [vmem:[#allocation6 + $0x24] sm:$0xf]
    %v81 = vld [vmem:[#allocation6 + $0x28] sm:$0xf]
    %v82 = vld [vmem:[#allocation6 + $0x2c] sm:$0xf]
    %v83 = vld [vmem:[#allocation6 + $0x30] sm:$0xf]
    %v84 = vld [vmem:[#allocation6 + $0x34] sm:$0xf]
    %v85 = vld [vmem:[#allocation6 + $0x38] sm:$0xf]
    %v86 = vld [vmem:[#allocation6 + $0x3c] sm:$0xf]
    %v87 = vld [vmem:[%s2] sm:$0x1]
    %v89 = vlaneseq
    %v90 = vshrl.u32 %v89, 7
    %v91 = vsub.s32 0, %v90
    %v92 = vrot.slane %v87, %v91
    %v96 = vunpack.c.l.b16 %v69
    %v97 = vunpack.c.l.b16 %v70
    %v98 = vpack.c.b16 %v97, %v96
    %v116 = vunpack.c.l.b16 %v71
    %v117 = vunpack.c.l.b16 %v72
    %v118 = vunpack.c.l.b16 %v73
    %v119 = vunpack.c.l.b16 %v74
    %v120 = vunpack.c.l.b16 %v75
    %v121 = vunpack.c.l.b16 %v76
    %v122 = vunpack.c.l.b16 %v77
    %v123 = vunpack.c.l.b16 %v78
    %v124 = vunpack.c.l.b16 %v79
    %v125 = vunpack.c.l.b16 %v80
    %v126 = vunpack.c.l.b16 %v81
    %v127 = vunpack.c.l.b16 %v82
    %v128 = vunpack.c.l.b16 %v83
    %v129 = vunpack.c.l.b16 %v84
    %v130 = vunpack.c.l.b16 %v85
    %v131 = vunpack.c.l.b16 %v86
    %v132 = vpack.c.b16 %v117, %v116
    %v133 = vpack.c.b16 %v119, %v118
    %v134 = vpack.c.b16 %v121, %v120
    %v135 = vpack.c.b16 %v123, %v122
    %v136 = vpack.c.b16 %v125, %v124
    %v137 = vpack.c.b16 %v127, %v126
    %v138 = vpack.c.b16 %v129, %v128
    %v139 = vpack.c.b16 %v131, %v130
    %148 = vmatprep.subr.bf16.mxu0 0
    %149 = vmatpush1.bf16.msra.mxu0 %v139
    %150 = vmatprep.subr.bf16.mxu0 0
    %151 = vmatpush1.bf16.msra.mxu0 %v138
    %152 = vmatprep.subr.bf16.mxu0 0
    %153 = vmatpush1.bf16.msra.mxu0 %v137
    %154 = vmatprep.subr.bf16.mxu0 0
    %155 = vmatpush1.bf16.msra.mxu0 %v136
    %156 = vmatprep.subr.bf16.mxu0 0
    %157 = vmatpush1.bf16.msra.mxu0 %v135
    %158 = vmatprep.subr.bf16.mxu0 0
    %159 = vmatpush1.bf16.msra.mxu0 %v134
    %160 = vmatprep.subr.bf16.mxu0 0
    %161 = vmatpush1.bf16.msra.mxu0 %v133
    %162 = vmatprep.subr.bf16.mxu0 0
    %163 = vmatpush1.bf16.msra.mxu0 %v132
    %164 = vmatprep.subr.bf16.mxu0 0
    %165 = vmatpush2.bf16.msra.mxu0 0
    %166 = vmatprep.subr.bf16.mxu0 0
    %167 = vmatpush2.bf16.msra.mxu0 0
    %168 = vmatprep.subr.bf16.mxu0 0
    %169 = vmatpush2.bf16.msra.mxu0 0
    %170 = vmatprep.subr.bf16.mxu0 0
    %171 = vmatpush2.bf16.msra.mxu0 0
    %172 = vmatprep.subr.bf16.mxu0 0
    %173 = vmatpush2.bf16.msra.mxu0 0
    %174 = vmatprep.subr.bf16.mxu0 0
    %175 = vmatpush2.bf16.msra.mxu0 0
    %176 = vmatprep.subr.bf16.mxu0 0
    %177 = vmatpush2.bf16.msra.mxu0 0
    %178 = vmatprep.subr.bf16.mxu0 0
    %179 = vmatpush2.bf16.msra.mxu0 0
    %180 = vmatprep.mubr.bf16.mxu0 0
    %181 = vmatmul.mubr.bf16.gmra.mxu0 %v98
    %v182 = vpop.f32.mrf.mxu0
    %v183 = vadd.f32 %v92, %v182
    %v184 = vpop.f32.mrf.mxu0
    %v185 = vpop.f32.mrf.mxu0
    %v186 = vadd.f32 %v92, %v185
    %v187 = vpop.f32.mrf.mxu0
    %188 = vdwg.mxu0
    %v189 = vmul.f32 %v183, 0.5
    %v190 = vmul.f32 %v186, 0.5
    %v191 = vmul.f32 %v183, 0.70710677
    %v192 = vmul.f32 %v186, 0.70710677
    %v193 = verf.f32.pop %v191
    %v194 = verf.f32.pop %v192
    %v195 = vadd.f32 %v193, 1.0
    %v196 = vadd.f32 %v194, 1.0
    %v197 = vmul.f32 %v189, %v195
    %v198 = vmul.f32 %v190, %v196
    %v199 = vld [vmem:[#allocation2] sm:$0xff]
    %v200 = vld [vmem:[#allocation2 + $0x8] sm:$0xff]
    %v201 = vpack.c.bf16 %v198, %v197
    %v202 = vld [vmem:[#allocation8] sm:$0xf]
    %v203 = vld [vmem:[#allocation8 + $0x4] sm:$0xf]
    %v204 = vld [vmem:[#allocation8 + $0x8] sm:$0xf]
    %v205 = vld [vmem:[#allocation8 + $0xc] sm:$0xf]
    %v206 = vld [vmem:[#allocation8 + $0x10] sm:$0xf]
    %v207 = vld [vmem:[#allocation8 + $0x14] sm:$0xf]
    %v208 = vld [vmem:[#allocation8 + $0x18] sm:$0xf]
    %v209 = vld [vmem:[#allocation8 + $0x1c] sm:$0xf]
    %v210 = vld [vmem:[#allocation8 + $0x20] sm:$0xf]
    %v211 = vld [vmem:[#allocation8 + $0x24] sm:$0xf]
    %v212 = vld [vmem:[#allocation8 + $0x28] sm:$0xf]
    %v213 = vld [vmem:[#allocation8 + $0x2c] sm:$0xf]
    %v214 = vld [vmem:[#allocation8 + $0x30] sm:$0xf]
    %v215 = vld [vmem:[#allocation8 + $0x34] sm:$0xf]
    %v216 = vld [vmem:[#allocation8 + $0x38] sm:$0xf]
    %v217 = vld [vmem:[#allocation8 + $0x3c] sm:$0xf]
    %v234 = vunpack.c.l.b16 %v202
    %v235 = vunpack.c.l.b16 %v203
    %v236 = vunpack.c.l.b16 %v204
    %v237 = vunpack.c.l.b16 %v205
    %v238 = vunpack.c.l.b16 %v206
    %v239 = vunpack.c.l.b16 %v207
    %v240 = vunpack.c.l.b16 %v208
    %v241 = vunpack.c.l.b16 %v209
    %v242 = vunpack.c.l.b16 %v210
    %v243 = vunpack.c.l.b16 %v211
    %v244 = vunpack.c.l.b16 %v212
    %v245 = vunpack.c.l.b16 %v213
    %v246 = vunpack.c.l.b16 %v214
    %v247 = vunpack.c.l.b16 %v215
    %v248 = vunpack.c.l.b16 %v216
    %v249 = vunpack.c.l.b16 %v217
    %v250 = vpack.c.b16 %v235, %v234
    %v251 = vpack.c.b16 %v237, %v236
    %v252 = vpack.c.b16 %v239, %v238
    %v253 = vpack.c.b16 %v241, %v240
    %v254 = vpack.c.b16 %v243, %v242
    %v255 = vpack.c.b16 %v245, %v244
    %v256 = vpack.c.b16 %v247, %v246
    %v257 = vpack.c.b16 %v249, %v248
    %266 = vmatprep.subr.bf16.mxu0 0
    %267 = vmatpush1.bf16.msra.mxu0 %v257
    %268 = vmatprep.subr.bf16.mxu0 0
    %269 = vmatpush1.bf16.msra.mxu0 %v256
    %270 = vmatprep.subr.bf16.mxu0 0
    %271 = vmatpush1.bf16.msra.mxu0 %v255
    %272 = vmatprep.subr.bf16.mxu0 0
    %273 = vmatpush1.bf16.msra.mxu0 %v254
    %274 = vmatprep.subr.bf16.mxu0 0
    %275 = vmatpush1.bf16.msra.mxu0 %v253
    %276 = vmatprep.subr.bf16.mxu0 0
    %277 = vmatpush1.bf16.msra.mxu0 %v252
    %278 = vmatprep.subr.bf16.mxu0 0
    %279 = vmatpush1.bf16.msra.mxu0 %v251
    %280 = vmatprep.subr.bf16.mxu0 0
    %281 = vmatpush1.bf16.msra.mxu0 %v250
    %282 = vmatprep.subr.bf16.mxu0 0
    %283 = vmatpush2.bf16.msra.mxu0 0
    %284 = vmatprep.subr.bf16.mxu0 0
    %285 = vmatpush2.bf16.msra.mxu0 0
    %286 = vmatprep.subr.bf16.mxu0 0
    %287 = vmatpush2.bf16.msra.mxu0 0
    %288 = vmatprep.subr.bf16.mxu0 0
    %289 = vmatpush2.bf16.msra.mxu0 0
    %290 = vmatprep.subr.bf16.mxu0 0
    %291 = vmatpush2.bf16.msra.mxu0 0
    %292 = vmatprep.subr.bf16.mxu0 0
    %293 = vmatpush2.bf16.msra.mxu0 0
    %294 = vmatprep.subr.bf16.mxu0 0
    %295 = vmatpush2.bf16.msra.mxu0 0
    %296 = vmatprep.subr.bf16.mxu0 0
    %297 = vmatpush2.bf16.msra.mxu0 0
    %298 = vmatprep.mubr.bf16.mxu0 0
    %299 = vmatmul.mubr.bf16.gmra.mxu0 %v201
    %v300 = vpop.f32.mrf.mxu0
    %v301 = vadd.f32 0.0, %v300
    %v302 = vpop.f32.mrf.mxu0
    %v303 = vpop.f32.mrf.mxu0
    %v304 = vadd.f32 0.0, %v303
    %v305 = vpop.f32.mrf.mxu0
    %306 = vdwg.mxu0
    %v307 = vadd.f32 %v199, %v301
    %v308 = vadd.f32 %v200, %v304
    %309 = vst [vmem:[#allocation2] sm:$0xff] %v307
    %310 = vst [vmem:[#allocation2 + $0x8] sm:$0xff] %v308
    // Predicated region
    $region38: #{tpu_custom_call.1} parent=1 // pred_check
      %p311 = pneg %p63
    $region39: #{tpu_custom_call.1} parent=1 // pred_check_branch
      %313 = sbr.rel (%p311) target = $region41
    $region40: #{tpu_custom_call.1} parent=1 // pred_region
      %v314 = vld [vmem:[#allocation2] sm:$0xff]
      %v315 = vld [vmem:[#allocation2 + $0x8] sm:$0xff]
      %v316 = vld [vmem:[%s4] sm:$0x1]
      %v318 = vlaneseq
      %v319 = vshrl.u32 %v318, 7
      %v320 = vsub.s32 0, %v319
      %v321 = vrot.slane %v316, %v320
      %v323 = vadd.f32 %v314, %v321
      %v324 = vadd.f32 %v315, %v321
      %325 = vst [vmem:[#allocation9] sm:$0xff] %v323
      %326 = vst [vmem:[#allocation9 + $0x8] sm:$0xff] %v324
    $region41: #{tpu_custom_call.1} parent=1 // pred_fallthru
      _
    // Predicated region
    $region42: #{tpu_custom_call.1} parent=1 // pred_check
      _
    $region43: #{tpu_custom_call.1} parent=1 // pred_check_branch
      %328 = sbr.rel (0) target = $region45
    $region44: #{tpu_custom_call.1} parent=1 // pred_region
      %s330 = ssub.s32 256, 256
      %331 = vsyncadd [#allocation5], %s330
      %s332 = sshll.u32 [#allocation9], 4
      %s333 = int_to_ptr.vmem [resolvable:$true] %s332
      %338 = dma.vmem_to_hbm [thread:$0]  %s333, 256, %s5, [#allocation5], 128, 128, 8
    $region45: #{tpu_custom_call.1} parent=1 // pred_fallthru
      _
    // Predicated region
    $region46: #{tpu_custom_call.1} parent=1 // pred_check
      _
    $region47: #{tpu_custom_call.1} parent=1 // pred_check_branch
      %340 = sbr.rel (0) target = $region49
    $region48: #{tpu_custom_call.1} parent=1 // pred_region
      %341 = dma.done [#allocation5], 256
    $region49: #{tpu_custom_call.1} parent=1 // pred_fallthru
      _
    %342 = vsyncpa [#allocation4], 1
    %343 = vsyncpa [#allocation7], 1
    %344 = vsyncpa [#allocation5], 1

</llo_original>
